<compile_context>
chip_gen: v5e
topology: v5e:2x2
jax: 0.10.0
libtpu: 0.0.40
codegen_flags: <defaults>
</compile_context>

<pallas_src>
import jax
import jax.numpy as jnp
from jax.experimental import pallas as pl
from jax.experimental.pallas import tpu as pltpu


# ---------------------------------------------------------------- kernels ---

def _se_fused_kernel(x_ref, w1_ref, w2_ref, o_ref):
    """x_ref/o_ref: (Bt, C, HW); w1_ref: (C, Cr); w2_ref: (Cr, C)."""
    hw = x_ref.shape[-1]
    # Squeeze: global average pool, accumulated in f32 (bf16-safe).
    y = jnp.sum(x_ref[...].astype(jnp.float32), axis=2) * (1.0 / hw)      # (Bt, C)
    # Excitation: two bias-free linears, ReLU then sigmoid (tiny MXU work).
    h = jnp.maximum(
        jnp.dot(y, w1_ref[...].astype(jnp.float32),
                preferred_element_type=jnp.float32), 0.0)                 # (Bt, Cr)
    s = jax.nn.sigmoid(
        jnp.dot(h, w2_ref[...].astype(jnp.float32),
                preferred_element_type=jnp.float32))                      # (Bt, C)
    # Scale: second read of the tile straight from VMEM, lane-dense store.
    o_ref[...] = (x_ref[...].astype(jnp.float32) * s[:, :, None]).astype(o_ref.dtype)


def _row_pool_kernel(x_ref, sum_ref):
    """x_ref: (Tr, HW); sum_ref: (Tr, 1) f32 spatial sums."""
    sum_ref[...] = jnp.sum(x_ref[...].astype(jnp.float32), axis=1, keepdims=True)


def _row_scale_kernel(x_ref, s_ref, o_ref):
    """x_ref/o_ref: (Tr, HW); s_ref: (Tr, 1) per-row gate."""
    o_ref[...] = (x_ref[...].astype(jnp.float32) * s_ref[...]).astype(o_ref.dtype)


# ------------------------------------------------------------ tile sizing ---

_MIN_GRID_STEPS = 8   # ~4 pipelined steps per TensorCore on 2-core (v7x) parts


def _vmem_budget(weight_bytes, max_block_bytes):
    try:
        vmem_phys = int(pltpu.get_tpu_info().vmem_capacity_bytes)
    except Exception:                      # CPU tracing / older runtimes
        vmem_phys = 64 << 20               # conservative: v7x per-TC VMEM
    usable = (vmem_phys * 3) // 4          # leave headroom for Mosaic scratch
    # Input and output blocks are each double-buffered (~4x block resident).
    budget = (usable - 2 * weight_bytes - (2 << 20)) // 4
    budget = max(min(budget, 16 << 20), 1 << 20)
    if max_block_bytes is not None:
        budget = min(budget, int(max_block_bytes))
    return budget, vmem_phys


def _vmem_limit(block_bytes, weight_bytes, vmem_phys):
    limit = 4 * block_bytes + 2 * weight_bytes + (4 << 20)
    return int(min(max(limit, 32 << 20), (vmem_phys * 7) // 8))


def _pick_tile(n, unit_bytes, budget, min_steps=_MIN_GRID_STEPS, align=1):
    """Largest divisor d of n with d*unit_bytes <= budget, d % align == 0
    (or d == n), and n // d >= min(min_steps, n); degrades gracefully."""
    divisors = [d for d in range(1, n + 1) if n % d == 0]
    fitting = [d for d in divisors
               if d * unit_bytes <= budget and (d % align == 0 or d == n)]
    if not fitting:
        fitting = [d for d in divisors if d * unit_bytes <= budget]
    if not fitting:
        # Even the smallest aligned tile blows the budget (extreme inputs):
        # take the smallest aligned divisor and let vmem_limit absorb it.
        aligned = [d for d in divisors if d % align == 0] or divisors
        return min(aligned)
    good = [d for d in fitting if n // d >= min(min_steps, n)]
    return max(good) if good else min(fitting)


# ----------------------------------------------------------------- wrapper --

def se_block(x_nchw, w1, w2, *, max_block_bytes=None):
    """SEBlock forward.

    x_nchw: (B, C, H, W); w1 = fc0.weight.T with shape (C, C//r);
    w2 = fc2.weight.T with shape (C//r, C).  Returns x * gate, same shape/dtype.
    """
    B, C, H, W = x_nchw.shape
    HW = H * W
    itemsize = jnp.dtype(x_nchw.dtype).itemsize
    weight_bytes = (w1.size * jnp.dtype(w1.dtype).itemsize
                    + w2.size * jnp.dtype(w2.dtype).itemsize)
    budget, vmem_phys = _vmem_budget(weight_bytes, max_block_bytes)

    per_image_bytes = C * HW * itemsize
    if per_image_bytes <= budget:
        # ------------- fused single-pass path (read x once, write out) -----
        x3 = x_nchw.reshape(B, C, HW)            # free reshape, no transpose
        bt = _pick_tile(B, per_image_bytes, budget)
        block = (bt, C, HW)
        out = pl.pallas_call(
            _se_fused_kernel,
            out_shape=jax.ShapeDtypeStruct((B, C, HW), x_nchw.dtype),
            grid=(B // bt,),
            in_specs=[
                pl.BlockSpec(block, lambda b: (b, 0, 0)),
                pl.BlockSpec(w1.shape, lambda b: (0, 0)),   # VMEM-resident
                pl.BlockSpec(w2.shape, lambda b: (0, 0)),   # VMEM-resident
            ],
            out_specs=pl.BlockSpec(block, lambda b: (b, 0, 0)),
            compiler_params=pltpu.CompilerParams(
                dimension_semantics=("parallel",),
                vmem_limit_bytes=_vmem_limit(bt * per_image_bytes,
                                             weight_bytes, vmem_phys),
            ),
        )(x3, w1, w2)
        return out.reshape(B, C, H, W)

    # ------------- two-pass path for images too large for VMEM -------------
    R = B * C
    x2 = x_nchw.reshape(R, HW)                   # free reshape, no transpose
    row_bytes = HW * itemsize
    tr = _pick_tile(R, row_bytes, budget, align=8)
    params = pltpu.CompilerParams(
        dimension_semantics=("parallel",),
        vmem_limit_bytes=_vmem_limit(tr * row_bytes, weight_bytes, vmem_phys),
    )

    sums = pl.pallas_call(
        _row_pool_kernel,
        out_shape=jax.ShapeDtypeStruct((R, 1), jnp.float32),
        grid=(R // tr,),
        in_specs=[pl.BlockSpec((tr, HW), lambda r: (r, 0))],
        out_specs=pl.BlockSpec((tr, 1), lambda r: (r, 0)),
        compiler_params=params,
    )(x2)

    # TODO(synk): the tiny (B, C) gate MLP for this large-image path runs as a
    # plain XLA op between the two pallas_calls (negligible vs. the x traffic).
    y = sums.reshape(B, C) * (1.0 / HW)
    h = jnp.maximum(jnp.dot(y, w1.astype(jnp.float32)), 0.0)
    s = jax.nn.sigmoid(jnp.dot(h, w2.astype(jnp.float32)))
    s2 = s.reshape(R, 1)

    out = pl.pallas_call(
        _row_scale_kernel,
        out_shape=jax.ShapeDtypeStruct((R, HW), x_nchw.dtype),
        grid=(R // tr,),
        in_specs=[pl.BlockSpec((tr, HW), lambda r: (r, 0)),
                  pl.BlockSpec((tr, 1), lambda r: (r, 0))],
        out_specs=pl.BlockSpec((tr, HW), lambda r: (r, 0)),
        compiler_params=params,
    )(x2, s2)
    return out.reshape(B, C, H, W)


se_block_jit = jax.jit(se_block, static_argnames=("max_block_bytes",))


if __name__ == "__main__":
    B, C, H, W = 2, 32, 16, 16
    reduction = 16
    Cr = C // reduction

    key = jax.random.PRNGKey(0)
    kx, k1, k2 = jax.random.split(key, 3)

    x = jax.random.normal(kx, (B, C, H, W), dtype=jnp.float32)
    # PyTorch Linear weights are (out, in); the kernel consumes the transposed
    # (in, out) forms so the gate is y @ W1 then @ W2.
    fc0_w = jax.random.normal(k1, (Cr, C), dtype=jnp.float32) * 0.1
    fc2_w = jax.random.normal(k2, (C, Cr), dtype=jnp.float32) * 0.1
    w1 = fc0_w.T        # (C, Cr)
    w2 = fc2_w.T        # (Cr, C)

    # Pure-JAX reference.
    y_ref = jnp.mean(x, axis=(2, 3))
    gate_ref = jax.nn.sigmoid(jnp.maximum(y_ref @ w1, 0.0) @ w2)
    out_ref = x * gate_ref[:, :, None, None]

    # Fused single-pass path.
    out_fused = se_block_jit(x, w1, w2)
    jax.block_until_ready(out_fused)
    assert jnp.allclose(out_fused, out_ref, atol=1e-5, rtol=1e-5)

    # Two-pass (large-image) path, forced via a tiny block budget.
    out_two = se_block_jit(x, w1, w2, max_block_bytes=16 << 10)
    jax.block_until_ready(out_two)
    assert jnp.allclose(out_two, out_ref, atol=1e-5, rtol=1e-5)

    print("KERNEL_OK")
</pallas_src>

<mosaic_0001>
module attributes {stable_mosaic.version = 11 : i64} {
  func.func @_se_fused_kernel(%arg0: i32, %arg1: memref<1x32x256xf32, #tpu.memory_space<vmem>>, %arg2: memref<32x2xf32, #tpu.memory_space<vmem>>, %arg3: memref<2x32xf32, #tpu.memory_space<vmem>>, %arg4: memref<1x32x256xf32, #tpu.memory_space<vmem>>) attributes {dimension_semantics = [#tpu.dimension_semantics<parallel>], iteration_bounds = array<i64: 2>, scalar_prefetch = 0 : i64, scratch_operands = 0 : i64, tpu.core_type = #tpu.core_type<tc>, window_params = [{transform_indices = @transform_0, window_bounds = array<i64: 1, 32, 256>}, {pipeline_mode = #tpu.pipeline_mode<synchronous>, transform_indices = @transform_1, window_bounds = array<i64: 32, 2>}, {pipeline_mode = #tpu.pipeline_mode<synchronous>, transform_indices = @transform_2, window_bounds = array<i64: 2, 32>}, {transform_indices = @transform_3, window_bounds = array<i64: 1, 32, 256>}]} {
    %c0 = arith.constant 0 : index
    %c0_0 = arith.constant 0 : index
    %c0_1 = arith.constant 0 : index
    %0 = vector.load %arg1[%c0, %c0_0, %c0_1] : memref<1x32x256xf32, #tpu.memory_space<vmem>>, vector<1x32x256xf32>
    %cst = arith.constant dense<0.000000e+00> : vector<1x32xf32>
    %1 = vector.multi_reduction <add>, %0, %cst [2] : vector<1x32x256xf32> to vector<1x32xf32>
    %cst_2 = arith.constant 3.906250e-03 : f32
    %2 = vector.broadcast %cst_2 : f32 to vector<1x32xf32>
    %3 = arith.mulf %1, %2 : vector<1x32xf32>
    %c0_3 = arith.constant 0 : index
    %c0_4 = arith.constant 0 : index
    %4 = vector.load %arg2[%c0_3, %c0_4] : memref<32x2xf32, #tpu.memory_space<vmem>>, vector<32x2xf32>
    %cst_5 = arith.constant dense<0.000000e+00> : vector<1x2xf32>
    %5 = tpu.matmul %3, %4, %cst_5 {dimension_numbers = #tpu.dot_dimension_numbers<[1], [0], [0], [1], [0, 0, 1, 1], [], []>} : vector<1x32xf32>, vector<32x2xf32>, vector<1x2xf32> -> vector<1x2xf32>
    %cst_6 = arith.constant 0.000000e+00 : f32
    %6 = vector.broadcast %cst_6 : f32 to vector<1x2xf32>
    %7 = arith.maximumf %5, %6 : vector<1x2xf32>
    %c0_7 = arith.constant 0 : index
    %c0_8 = arith.constant 0 : index
    %8 = vector.load %arg3[%c0_7, %c0_8] : memref<2x32xf32, #tpu.memory_space<vmem>>, vector<2x32xf32>
    %cst_9 = arith.constant dense<0.000000e+00> : vector<1x32xf32>
    %9 = tpu.matmul %7, %8, %cst_9 {dimension_numbers = #tpu.dot_dimension_numbers<[1], [0], [0], [1], [0, 0, 1, 1], [], []>} : vector<1x2xf32>, vector<2x32xf32>, vector<1x32xf32> -> vector<1x32xf32>
    %10 = arith.negf %9 : vector<1x32xf32>
    %11 = math.exp %10 : vector<1x32xf32>
    %cst_10 = arith.constant 1.000000e+00 : f32
    %12 = vector.broadcast %cst_10 : f32 to vector<1x32xf32>
    %13 = arith.addf %12, %11 : vector<1x32xf32>
    %14 = arith.divf %12, %13 : vector<1x32xf32>
    %c0_11 = arith.constant 0 : index
    %c0_12 = arith.constant 0 : index
    %c0_13 = arith.constant 0 : index
    %15 = vector.load %arg1[%c0_11, %c0_12, %c0_13] : memref<1x32x256xf32, #tpu.memory_space<vmem>>, vector<1x32x256xf32>
    %16 = vector.shape_cast %14 : vector<1x32xf32> to vector<1x32x1xf32>
    %17 = vector.broadcast %16 : vector<1x32x1xf32> to vector<1x32x256xf32>
    %18 = arith.mulf %15, %17 : vector<1x32x256xf32>
    %c0_14 = arith.constant 0 : index
    %c0_15 = arith.constant 0 : index
    %c0_16 = arith.constant 0 : index
    %19 = vector.load %arg4[%c0_14, %c0_15, %c0_16] : memref<1x32x256xf32, #tpu.memory_space<vmem>>, vector<1x32x256xf32>
    tpu.vector_store %arg4[%c0_14, %c0_15, %c0_16], %18 {strides = array<i32>} : memref<1x32x256xf32, #tpu.memory_space<vmem>>, vector<1x32x256xf32>,
    return
  }
  func.func @transform_0(%arg0: i32) -> (i32, i32, i32) {
    %c0_i32 = arith.constant 0 : i32
    %c0_i32_0 = arith.constant 0 : i32
    %c0_i32_1 = arith.constant 0 : i32
    return %arg0, %c0_i32, %c0_i32_0 : i32, i32, i32
  }
  func.func @transform_1(%arg0: i32) -> (i32, i32) {
    %c0_i32 = arith.constant 0 : i32
    %c0_i32_0 = arith.constant 0 : i32
    %c0_i32_1 = arith.constant 0 : i32
    return %c0_i32, %c0_i32_0 : i32, i32
  }
  func.func @transform_2(%arg0: i32) -> (i32, i32) {
    %c0_i32 = arith.constant 0 : i32
    %c0_i32_0 = arith.constant 0 : i32
    %c0_i32_1 = arith.constant 0 : i32
    return %c0_i32, %c0_i32_0 : i32, i32
  }
  func.func @transform_3(%arg0: i32) -> (i32, i32, i32) {
    %c0_i32 = arith.constant 0 : i32
    %c0_i32_0 = arith.constant 0 : i32
    %c0_i32_1 = arith.constant 0 : i32
    return %arg0, %c0_i32, %c0_i32_0 : i32, i32, i32
  }
}

</mosaic_0001>

<llo_original>
// kernel: se_block.1
$region0: #{se_block.1}
  #allocation0 [shape = 'u32[]', space=smem, size = 0x4, offset = 0x4, fixed_abs, tag = 'smem constant byte address 0x4 - core index']
  #allocation1 [shape = 'u32[72,128]{1,0:T(1,128)}', space=vmem, size = 0x9000, scoped, tag = 'internal scratch']
  %s0 = inlined_call_operand.vmem [shape: f32[2,32,256], index: 0, kind: input, shape index: {}]
  %s1 = inlined_call_operand.vmem [shape: f32[32,2], index: 1, kind: input, shape index: {}]
  %s2 = inlined_call_operand.vmem [shape: f32[2,32], index: 2, kind: input, shape index: {}]
  %s3 = inlined_call_operand.vmem [shape: f32[2,32,256], index: 3, kind: output, shape index: {}]
  %s4 = sld [smem:[#allocation0]]
  $region45: #{se_block.1} parent=0
    _
  %s6 = ssub.s32 1, %s4
  %s7 = scalar_select 0, %s6, %s4
  loop: start=0, step=1, limit=4
  $region2: #{se_block.1} parent=0 // loop_pre_header
    _
  $region3: #{se_block.1} parent=0 // loop_header
    %s9 = sphi 0, %s13
    %p10 = scmp.ge.s32.totalorder %s9, 4
    %s19 = sphi 0, %s21
    %s22 = sphi 0, %s19
    %s23 = sphi 0, %s22
    %s39 = sphi 0, %s23
    %s43 = sphi 0, %s43
    %s45 = sphi 0, %s43
    %s46 = sphi 0, %s45
    %s60 = sphi 0, %s46
    %s64 = sphi 0, %s64
    %s66 = sphi 0, %s64
    %s67 = sphi 0, %s66
    %s81 = sphi 0, %s67
    %s87 = sphi 0, %s89
    %s90 = sphi 0, %s87
    %s91 = sphi 0, %s90
    %s107 = sphi 0, %s91
  $region4: #{se_block.1} parent=0 // loop_header_branch
    %12 = sbr.rel (%p10) target = $region8
  $region5: #{se_block.1} parent=0 // loop_body
    %s14 = ssub.s32 %s9, 1
    %s15 = ssub.s32 %s9, 2
    %s16 = sadd.s32 %s9, 1
    %s17 = ssub.s32 %s9, %s16
    %p18 = scmp.eq.s32.totalorder %s17, 0
    %s20 = sadd.s32 %s19, 1
    %s21 = scalar_select %p18, %s19, %s20
    %p24 = pneg %p18
    %p25 = scmp.eq.s32.totalorder %s9, 1
    %p26 = por %p24, %p25
    %p27 = scmp.ne.s32.totalorder %s19, %s22
    %p28 = scmp.eq.s32.totalorder %s9, 0
    %p29 = por %p27, %p28
    %p30 = scmp.ne.s32.totalorder %s19, %s22
    %p31 = scmp.eq.s32.totalorder %s14, 1
    %p32 = por %p30, %p31
    %p33 = scmp.ne.s32.totalorder %s22, %s23
    %p34 = scmp.eq.s32.totalorder %s14, 0
    %p35 = por %p33, %p34
    %p36 = scmp.ne.s32.totalorder %s22, %s23
    %p37 = scmp.eq.s32.totalorder %s15, 1
    %p38 = por %p36, %p37
    %p40 = scmp.ne.s32.totalorder %s23, %s39
    %p41 = scmp.eq.s32.totalorder %s15, 0
    %p42 = por %p40, %p41
    %s44 = sadd.s32 %s43, 1
    %p47 = scmp.eq.s32.totalorder %s9, 1
    %p48 = scmp.ne.s32.totalorder %s43, %s45
    %p49 = scmp.eq.s32.totalorder %s9, 0
    %p50 = por %p48, %p49
    %p51 = scmp.ne.s32.totalorder %s43, %s45
    %p52 = scmp.eq.s32.totalorder %s14, 1
    %p53 = por %p51, %p52
    %p54 = scmp.ne.s32.totalorder %s45, %s46
    %p55 = scmp.eq.s32.totalorder %s14, 0
    %p56 = por %p54, %p55
    %p57 = scmp.ne.s32.totalorder %s45, %s46
    %p58 = scmp.eq.s32.totalorder %s15, 1
    %p59 = por %p57, %p58
    %p61 = scmp.ne.s32.totalorder %s46, %s60
    %p62 = scmp.eq.s32.totalorder %s15, 0
    %p63 = por %p61, %p62
    %s65 = sadd.s32 %s64, 1
    %p68 = scmp.eq.s32.totalorder %s9, 1
    %p69 = scmp.ne.s32.totalorder %s64, %s66
    %p70 = scmp.eq.s32.totalorder %s9, 0
    %p71 = por %p69, %p70
    %p72 = scmp.ne.s32.totalorder %s64, %s66
    %p73 = scmp.eq.s32.totalorder %s14, 1
    %p74 = por %p72, %p73
    %p75 = scmp.ne.s32.totalorder %s66, %s67
    %p76 = scmp.eq.s32.totalorder %s14, 0
    %p77 = por %p75, %p76
    %p78 = scmp.ne.s32.totalorder %s66, %s67
    %p79 = scmp.eq.s32.totalorder %s15, 1
    %p80 = por %p78, %p79
    %p82 = scmp.ne.s32.totalorder %s67, %s81
    %p83 = scmp.eq.s32.totalorder %s15, 0
    %p84 = por %p82, %p83
    %s85 = ssub.s32 %s9, %s16
    %p86 = scmp.eq.s32.totalorder %s85, 0
    %s88 = sadd.s32 %s87, 1
    %s89 = scalar_select %p86, %s87, %s88
    %p92 = pneg %p86
    %p93 = scmp.eq.s32.totalorder %s9, 1
    %p94 = por %p92, %p93
    %p95 = scmp.ne.s32.totalorder %s87, %s90
    %p96 = scmp.eq.s32.totalorder %s9, 0
    %p97 = por %p95, %p96
    %p98 = scmp.ne.s32.totalorder %s87, %s90
    %p99 = scmp.eq.s32.totalorder %s14, 1
    %p100 = por %p98, %p99
    %p101 = scmp.ne.s32.totalorder %s90, %s91
    %p102 = scmp.eq.s32.totalorder %s14, 0
    %p103 = por %p101, %p102
    %p104 = scmp.ne.s32.totalorder %s90, %s91
    %p105 = scmp.eq.s32.totalorder %s15, 1
    %p106 = por %p104, %p105
    %p108 = scmp.ne.s32.totalorder %s91, %s107
    %p109 = scmp.eq.s32.totalorder %s15, 0
    %p110 = por %p108, %p109
    %p111 = scmp.le.s32.totalorder 1, %s9
    %p112 = scmp.lt.s32.totalorder %s9, 3
    %p113 = pnand %p111, %p112
    %p114 = pneg %p113
    // Predicated region
    $region9: #{se_block.1} parent=5 // pred_check
      _
    $region10: #{se_block.1} parent=5 // pred_check_branch
      %116 = sbr.rel (%p113) target = $region12
    $region11: #{se_block.1} parent=5 // pred_region
      %s117 = ssub.s32 %s9, 1
      // Predicated region
      $region13: #{se_block.1} parent=11 // pred_check
        %p118 = pneg %p56
      $region14: #{se_block.1} parent=11 // pred_check_branch
        %120 = sbr.rel (%p118) target = $region16
      $region15: #{se_block.1} parent=11 // pred_region
        _
      $region16: #{se_block.1} parent=11 // pred_fallthru
        _
      // Predicated region
      $region17: #{se_block.1} parent=11 // pred_check
        %p121 = pneg %p77
      $region18: #{se_block.1} parent=11 // pred_check_branch
        %123 = sbr.rel (%p121) target = $region20
      $region19: #{se_block.1} parent=11 // pred_region
        _
      $region20: #{se_block.1} parent=11 // pred_fallthru
        _
    $region12: #{se_block.1} parent=5 // pred_fallthru
      _
    %p124 = scmp.lt.s32.totalorder %s9, 2
    // Predicated region
    $region21: #{se_block.1} parent=5 // pred_check
      %p125 = pneg %p124
    $region22: #{se_block.1} parent=5 // pred_check_branch
      %127 = sbr.rel (%p125) target = $region24
    $region23: #{se_block.1} parent=5 // pred_region
      // Predicated region
      $region25: #{se_block.1} parent=23 // pred_check
        %p128 = pneg %p29
      $region26: #{se_block.1} parent=23 // pred_check_branch
        %130 = sbr.rel (%p128) target = $region28
      $region27: #{se_block.1} parent=23 // pred_region
        %p131 = scmp.lt.s32.totalorder %s9, 1
        %s132 = scalar_select %p131, %s9, 1
        %s133 = smul.addr %s132, 8
        %s134 = smul.addr %s133, 8
        %s135 = scalar_lea.vmem %s0, %s134
      $region28: #{se_block.1} parent=23 // pred_fallthru
        _
    $region24: #{se_block.1} parent=5 // pred_fallthru
      _
    %p136 = scmp.le.s32.totalorder 1, %s9
    %p137 = scmp.lt.s32.totalorder %s9, 3
    %p138 = pnand %p136, %p137
    %p139 = pneg %p138
    // Predicated region
    $region29: #{se_block.1} parent=5 // pred_check
      _
    $region30: #{se_block.1} parent=5 // pred_check_branch
      %141 = sbr.rel (%p138) target = $region32
    $region31: #{se_block.1} parent=5 // pred_region
      %s142 = ssub.s32 %s9, 1
      %p143 = scmp.lt.s32.totalorder %s14, 1
      %s144 = scalar_select %p143, %s14, 1
      %s145 = smul.addr %s144, 8
      %s146 = smul.addr %s145, 8
      %s147 = scalar_lea.vmem %s0, %s146
      %p148 = pneg %p35
      %p149 = pneg %p32
      %p150 = pneg %p56
      %p151 = pneg %p53
      %p152 = pneg %p77
      %p153 = pneg %p74
      %p154 = pneg %p103
      %p155 = pneg %p100
      %p156 = scmp.lt.s32.totalorder %s14, 1
      %s157 = scalar_select %p156, %s14, 1
      %s158 = smul.addr %s157, 8
      %s159 = smul.addr %s158, 8
      %s160 = scalar_lea.vmem %s3, %s159
      %p161 = scmp.lt.s32.totalorder %s14, 1
      %s162 = scalar_select %p161, %s14, 1
      %s163 = smul.addr %s162, 8
      %s164 = smul.addr %s163, 8
      %s165 = scalar_lea.vmem %s0, %s164
      %p166 = scmp.lt.s32.totalorder %s14, 1
      %s167 = scalar_select %p166, %s14, 1
      %s168 = smul.addr %s167, 8
      %s169 = smul.addr %s168, 8
      %s170 = scalar_lea.vmem %s3, %s169
      %v171 = vld [vmem:[%s165] sm:$0xff]
      %v172 = vld [vmem:[%s165 + $0x8] sm:$0xff]
      %v173 = vld [vmem:[%s165 + $0x10] sm:$0xff]
      %v174 = vld [vmem:[%s165 + $0x18] sm:$0xff]
      %v175 = vld [vmem:[%s165 + $0x20] sm:$0xff]
      %v176 = vld [vmem:[%s165 + $0x28] sm:$0xff]
      %v177 = vld [vmem:[%s165 + $0x30] sm:$0xff]
      %v178 = vld [vmem:[%s165 + $0x38] sm:$0xff]
      %v179 = vadd.f32 %v171, %v172
      %180 = vadd.xlane.f32.xlu0 %v179
      %v181 = vpop.xlane.xlu0 %180
      %v182 = vadd.f32 %v173, %v174
      %183 = vadd.xlane.f32.xlu0 %v182
      %v184 = vpop.xlane.xlu0 %183
      %v185 = vadd.f32 %v175, %v176
      %186 = vadd.xlane.f32.xlu0 %v185
      %v187 = vpop.xlane.xlu0 %186
      %v188 = vadd.f32 %v177, %v178
      %189 = vadd.xlane.f32.xlu0 %v188
      %v190 = vpop.xlane.xlu0 %189
      %v191 = vmul.f32 %v181, 0.00390625
      %v192 = vmul.f32 %v184, 0.00390625
      %v193 = vmul.f32 %v187, 0.00390625
      %v194 = vmul.f32 %v190, 0.00390625
      %v195 = vld [vmem:[%s1] sm:$0xff]
      %v196 = vld [vmem:[%s1 + $0x8] sm:$0xff]
      %v197 = vld [vmem:[%s1 + $0x10] sm:$0xff]
      %v198 = vld [vmem:[%s1 + $0x18] sm:$0xff]
      %v203 = vlaneseq
      %v204 = vand.u32 %v203, 127
      %v205 = vperm.slane %v191, %v204
      %v206 = vadd.s32 %v204, 4294967288
      %v207 = vperm.slane %v192, %v206
      %vm208 = vcmask 130112
      %v209 = vsel %vm208, %v207, %v205
      %v210 = vadd.s32 %v204, 4294967280
      %v211 = vperm.slane %v193, %v210
      %vm212 = vcmask 195712
      %v213 = vsel %vm212, %v211, %v209
      %v214 = vadd.s32 %v204, 4294967272
      %v215 = vperm.slane %v194, %v214
      %vm216 = vcmask 261312
      %v217 = vsel %vm216, %v215, %v213
      %vm218 = vcmask 261120
      %v219 = vsel %vm218, %v217, 0
      %221 = vmatpush.msra.mxu0 0.0
      %222 = vmatpush.msra.mxu0 0.0
      %223 = vmatpush.msra.mxu0 0.0
      %224 = vmatpush.msra.mxu0 0.0
      %225 = vmatpush.msra.mxu0 0.0
      %226 = vmatpush.msra.mxu0 0.0
      %227 = vmatpush.msra.mxu0 0.0
      %228 = vmatpush.msra.mxu0 0.0
      %229 = vmatpush.msra.mxu0 0.0
      %230 = vmatpush.msra.mxu0 0.0
      %231 = vmatpush.msra.mxu0 0.0
      %232 = vmatpush.msra.mxu0 0.0
      %233 = vmatpush.msra.mxu0 %v198
      %234 = vmatpush.msra.mxu0 %v197
      %235 = vmatpush.msra.mxu0 %v196
      %236 = vmatpush.msra.mxu0 %v195
      %237 = vmatmul.f32.gmra.mxu0 %v219
      %v238 = vpop.f32.mrf.mxu0
      %v239 = vadd.f32 0.0, %v238
      %240 = vdwg.mxu0
      %v241 = vmax.f32 %v239, 0.0
      %v242 = vld [vmem:[%s2] sm:$0x3]
      %vm243 = vcmask 15360
      %v245 = vsel %vm243, %v241, 0
      %vm247 = vcmask 1041408
      %v249 = vsel %vm247, %v242, 0
      %251 = vmatpush.msra.mxu0 0.0
      %252 = vmatpush.msra.mxu0 0.0
      %253 = vmatpush.msra.mxu0 0.0
      %254 = vmatpush.msra.mxu0 0.0
      %255 = vmatpush.msra.mxu0 0.0
      %256 = vmatpush.msra.mxu0 0.0
      %257 = vmatpush.msra.mxu0 0.0
      %258 = vmatpush.msra.mxu0 0.0
      %259 = vmatpush.msra.mxu0 0.0
      %260 = vmatpush.msra.mxu0 0.0
      %261 = vmatpush.msra.mxu0 0.0
      %262 = vmatpush.msra.mxu0 0.0
      %263 = vmatpush.msra.mxu0 0.0
      %264 = vmatpush.msra.mxu0 0.0
      %265 = vmatpush.msra.mxu0 0.0
      %266 = vmatpush.msra.mxu0 %v249
      %267 = vmatmul.f32.gmra.mxu0 %v245
      %v268 = vpop.f32.mrf.mxu0
      %v269 = vadd.f32 0.0, %v268
      %270 = vdwg.mxu0
      %v271 = vxor.u32 %v269, 2147483648
      %v272 = vmul.f32 %v271, 1.442695
      %v273 = vpow.pop %v272
      %v274 = vadd.f32 %v273, 1.0
      %v275 = vrcp.pop %v274
      %v276 = vmul.f32 %v274, %v275
      %v277 = vsub.f32 1.0, %v276
      %v278 = vmul.f32 %v275, %v277
      %v279 = vadd.f32 %v275, %v278
      %vm280 = vweird.f32 %v274
      %vm281 = vweird.f32 %v275
      %vm282 = vmor %vm280, %vm281
      %v283 = vsel %vm282, %v275, %v279
      %v284 = vand.u32 2147483647, %v274
      %vm285 = vcmp.eq.f32.partialorder %v284, 8.507059e+37
      %v286 = vand.u32 %v274, 2147483648
      %v287 = vor.u32 1.1754944e-38, %v286
      %v288 = vsel %vm285, %v287, %v283
      %v289 = vmul.f32 1.0, %v288
      %v290 = vperm.slane %v289, 0
      %v291 = vlaneseq
      %v292 = vshrl.u32 %v291, 7
      %294 = vset.pattern.permute.xlu0 %v292
      %295 = vperm.xlu0 %294, %v290
      %v296 = vpop.permute.xlu0 %295
      %v297 = vlaneseq
      %v298 = vshrl.u32 %v297, 7
      %v299 = vadd.s32 %v298, 8
      %300 = vset.pattern.permute.xlu0 %v299
      %301 = vperm.xlu0 %300, %v290
      %v302 = vpop.permute.xlu0 %301
      %v303 = vlaneseq
      %v304 = vshrl.u32 %v303, 7
      %v305 = vadd.s32 %v304, 16
      %306 = vset.pattern.permute.xlu0 %v305
      %307 = vperm.xlu0 %306, %v290
      %v308 = vpop.permute.xlu0 %307
      %v309 = vlaneseq
      %v310 = vshrl.u32 %v309, 7
      %v311 = vadd.s32 %v310, 24
      %312 = vset.pattern.permute.xlu0 %v311
      %313 = vperm.xlu0 %312, %v290
      %v314 = vpop.permute.xlu0 %313
      %v315 = vmul.f32 %v171, %v296
      %v316 = vmul.f32 %v172, %v296
      %v317 = vmul.f32 %v173, %v302
      %v318 = vmul.f32 %v174, %v302
      %v319 = vmul.f32 %v175, %v308
      %v320 = vmul.f32 %v176, %v308
      %v321 = vmul.f32 %v177, %v314
      %v322 = vmul.f32 %v178, %v314
      %323 = vst [vmem:[%s170] sm:$0xff] %v315
      %324 = vst [vmem:[%s170 + $0x8] sm:$0xff] %v316
      %325 = vst [vmem:[%s170 + $0x10] sm:$0xff] %v317
      %326 = vst [vmem:[%s170 + $0x18] sm:$0xff] %v318
      %327 = vst [vmem:[%s170 + $0x20] sm:$0xff] %v319
      %328 = vst [vmem:[%s170 + $0x28] sm:$0xff] %v320
      %329 = vst [vmem:[%s170 + $0x30] sm:$0xff] %v321
      %330 = vst [vmem:[%s170 + $0x38] sm:$0xff] %v322
      %p331 = scmp.lt.s32.totalorder %s14, 1
      %s332 = scalar_select %p331, %s14, 1
      %s333 = smul.addr %s332, 8
      %s334 = smul.addr %s333, 8
      %s335 = scalar_lea.vmem %s3, %s334
      // Predicated region
      $region33: #{se_block.1} parent=31 // pred_check
        %p336 = pneg %p100
      $region34: #{se_block.1} parent=31 // pred_check_branch
        %338 = sbr.rel (%p336) target = $region36
      $region35: #{se_block.1} parent=31 // pred_region
        _
      $region36: #{se_block.1} parent=31 // pred_fallthru
        _
    $region32: #{se_block.1} parent=5 // pred_fallthru
      _
    %p339 = scmp.le.s32.totalorder 2, %s9
    // Predicated region
    $region37: #{se_block.1} parent=5 // pred_check
      %p340 = pneg %p339
    $region38: #{se_block.1} parent=5 // pred_check_branch
      %342 = sbr.rel (%p340) target = $region40
    $region39: #{se_block.1} parent=5 // pred_region
      %s343 = ssub.s32 %s9, 2
      // Predicated region
      $region41: #{se_block.1} parent=39 // pred_check
        %p344 = pneg %p106
      $region42: #{se_block.1} parent=39 // pred_check_branch
        %346 = sbr.rel (%p344) target = $region44
      $region43: #{se_block.1} parent=39 // pred_region
        %p347 = scmp.lt.s32.totalorder %s15, 1
        %s348 = scalar_select %p347, %s15, 1
        %s349 = smul.addr %s348, 8
        %s350 = smul.addr %s349, 8
        %s351 = scalar_lea.vmem %s3, %s350
      $region44: #{se_block.1} parent=39 // pred_fallthru
        _
    $region40: #{se_block.1} parent=5 // pred_fallthru
      _
  $region6: #{se_block.1} parent=0 // loop_footer
    %s13 = sadd.s32 1, %s9
  $region7: #{se_block.1} parent=0 // loop_footer_branch
    %8 = sbr.rel target = $region3
  $region8: #{se_block.1} parent=0 // loop_exit
    _

</llo_original>
